<compile_context>
chip_gen: v6e
topology: v6e:2x2x1
jax: 0.10.0
libtpu: 0.0.40
codegen_flags: <defaults>
</compile_context>

<pallas_src>
import functools

import jax
import jax.numpy as jnp
import numpy as np
from jax.experimental import pallas as pl
from jax.experimental.pallas import tpu as pltpu


def cfcc_lstm_kernel(gx_ref, whh_ref, fcw_ref, fcb_ref, cw_ref, cb_ref, out_ref, *, T, H):
    """Whole CFCCLSTM forward for one batch tile resident in VMEM.

    gx_ref : (T, B, 4H)   precomputed x_t @ W_ih^T + (b_ih + b_hh), time-major, f32
    whh_ref: (H, 4H)      W_hh^T (f32 or bf16)
    fcw_ref: (T*H, PHp)   W_fc^T, fc-output dim lane-padded to PHp (multiple of 128)
    fcb_ref: (1, PHp)     b_fc, lane-padded
    cw_ref : (PHp, Pp)    collapsed Conv1d weights, padded rows/lanes
    cb_ref : (1, Pp)      conv bias, lane-padded
    out_ref: (B, Pp)
    """
    B = gx_ref.shape[1]
    G = 4 * H
    wdt = whh_ref.dtype                      # matmul-operand dtype (f32 or bf16)
    whh = whh_ref[...]                       # (H, 4H), loaded once

    # Hoisted out of the loop: which lanes of the (B, 4H) gate tile get tanh
    # (the "g" block; PyTorch gate order is i, f, g, o).
    lane = jax.lax.broadcasted_iota(jnp.int32, (B, G), 1)
    g_mask = (lane >= 2 * H) & (lane < 3 * H)

    # TODO(synk): move h/c/fc_acc into VMEM scratch via scratch_shapes if a larger
    # batch_tile or longer T starts spilling vregs in the unrolled body.
    h = jnp.zeros((B, H), jnp.float32)
    c = jnp.zeros((B, H), jnp.float32)
    fc_acc = jnp.zeros((B, fcb_ref.shape[-1]), jnp.float32)

    # T is small & static -> unrolled, static VMEM slices.
    for t in range(T):
        gates = gx_ref[t] + jnp.dot(h.astype(wdt), whh,
                                    preferred_element_type=jnp.float32)      # (B, 4H)
        # Single EUP tanh pass over all 128 lanes; sigmoid(x) = 0.5 * (tanh(x/2) + 1)
        # for the i/f/o blocks is reconstructed with cheap VPU mul/add/select.
        th = jnp.tanh(jnp.where(g_mask, gates, 0.5 * gates))
        act = jnp.where(g_mask, th, 0.5 * (th + 1.0))
        i_g = act[:, 0 * H:1 * H]
        f_g = act[:, 1 * H:2 * H]
        g_g = act[:, 2 * H:3 * H]
        o_g = act[:, 3 * H:4 * H]
        c = f_g * c + i_g * g_g
        h = o_g * jnp.tanh(c)
        # Per-step FC contribution (== torch.flatten(output, 1) @ W_fc^T, fused in-loop).
        # TODO(synk): on v5e (MRF result FIFO) measure moving this after the loop via a
        # (T, B, H) sublane-major scratch; on v6e/v7x the in-loop form is preferred.
        fc_acc = fc_acc + jnp.dot(h.astype(wdt), fcw_ref[t * H:(t + 1) * H, :],
                                  preferred_element_type=jnp.float32)

    fc = jnp.maximum(fc_acc + fcb_ref[...], 0.0)           # (B, PHp), ReLU after FC
    # Conv1d(P, P, kernel_size=H) over a length-H signal collapses to a matmul;
    # weights are pre-padded (zero rows/lanes) so this store is lane-dense.
    out_ref[...] = (jnp.dot(fc.astype(cw_ref.dtype), cw_ref[...],
                            preferred_element_type=jnp.float32) + cb_ref[...])


def cfcc_lstm_forward(x, params, *, batch_tile=None, use_bf16_matmul=False):
    """x: (B, T, D_in) batch-first (PyTorch convention). Returns (B, P) float32."""
    B, T, D = x.shape
    H = params["w_hh_T"].shape[0]
    P = params["conv_b"].shape[-1]
    PH = P * H
    cdt = jnp.bfloat16 if use_bf16_matmul else jnp.float32

    def round_up(a, b):
        return pl.cdiv(a, b) * b

    # Batch tiling: fat M for the MXU (up to 128 rows), but always >= 2 grid tiles when
    # B >= 2 so the "parallel" batch axis shards across both TensorCores on v7x.
    if batch_tile is None:
        batch_tile = min(128, round_up(B, 8))
    batch_tile = round_up(batch_tile, 8)
    num_tiles = pl.cdiv(B, batch_tile)
    if num_tiles < 2 and B >= 2:
        num_tiles = 2
    Bp = num_tiles * batch_tile

    # Pad the narrow x (D lanes) rather than the 4x wider gates_x.
    if Bp != B:
        x = jnp.pad(x, ((0, Bp - B), (0, 0), (0, 0)))

    # Hoisted input projection with fused LSTM biases, time-major and lane-dense (4H).
    # TODO(synk): for large B/T/H, move this matmul inside the kernel per batch tile to
    # avoid the HBM round-trip of gates_x.
    gates_x = jnp.einsum("btd,dg->tbg",
                         x.astype(cdt), params["w_ih_T"].astype(cdt),
                         preferred_element_type=jnp.float32) + params["b"]   # (T, Bp, 4H)

    # Lane-dense fc output dim (P*H -> PHp) and conv output dim (P -> Pp): zero-pad the
    # tiny weights so every fc/conv vector op and the final store are unmasked.
    PHp = round_up(PH, 128)
    Pp = round_up(P, 128)
    fc_w = jnp.pad(params["fc_w_T"], ((0, 0), (0, PHp - PH))).astype(cdt)    # (T*H, PHp)
    fc_b = jnp.pad(params["fc_b"], ((0, 0), (0, PHp - PH)))                  # (1, PHp)
    conv_w = jnp.pad(params["conv_w_T"],
                     ((0, PHp - PH), (0, Pp - P))).astype(cdt)               # (PHp, Pp)
    conv_b = jnp.pad(params["conv_b"], ((0, 0), (0, Pp - P)))                # (1, Pp)

    w_hh = params["w_hh_T"].astype(cdt)      # (H, 4H)

    kernel = functools.partial(cfcc_lstm_kernel, T=T, H=H)
    # TODO(synk): when scaling H/T/P, add a second "arbitrary" grid axis tiling fc_w over
    # the PHp output dim so double-buffered slabs stay well under v7x's 64 MiB VMEM.
    out = pl.pallas_call(
        kernel,
        out_shape=jax.ShapeDtypeStruct((Bp, Pp), jnp.float32),
        grid=(num_tiles,),
        in_specs=[
            pl.BlockSpec((T, batch_tile, 4 * H), lambda i: (0, i, 0)),   # gates_x
            pl.BlockSpec((H, 4 * H), lambda i: (0, 0)),                  # W_hh^T
            pl.BlockSpec((T * H, PHp), lambda i: (0, 0)),                # W_fc^T (padded)
            pl.BlockSpec((1, PHp), lambda i: (0, 0)),                    # b_fc (padded)
            pl.BlockSpec((PHp, Pp), lambda i: (0, 0)),                   # W_conv_flat^T (padded)
            pl.BlockSpec((1, Pp), lambda i: (0, 0)),                     # b_conv (padded)
        ],
        out_specs=pl.BlockSpec((batch_tile, Pp), lambda i: (i, 0)),
        compiler_params=pltpu.CompilerParams(
            dimension_semantics=("parallel",),
            vmem_limit_bytes=32 * 1024 * 1024),
    )(gates_x, w_hh, fc_w, fc_b, conv_w, conv_b)

    return out[:B, :P]


def init_params(key, input_size, hidden_size, history_length, prediction_length):
    """Deterministic synthetic parameters matching the nn.Module shapes."""
    H, D, T, P = hidden_size, input_size, history_length, prediction_length
    ks = jax.random.split(key, 8)
    s = 1.0 / np.sqrt(H)
    u = lambda k, shape: jax.random.uniform(k, shape, jnp.float32, -s, s)

    w_ih = u(ks[0], (4 * H, D))                 # nn.LSTM weight_ih_l0
    w_hh = u(ks[1], (4 * H, H))                 # nn.LSTM weight_hh_l0
    b_ih = u(ks[2], (4 * H,))
    b_hh = u(ks[3], (4 * H,))
    fc_w = u(ks[4], (P * H, T * H))             # nn.Linear(T*H, P*H)
    fc_b = u(ks[5], (P * H,))
    conv_w = u(ks[6], (P, P, H))                # nn.Conv1d(P, P, kernel_size=H)
    conv_b = u(ks[7], (P,))

    return {
        "w_ih_T": w_ih.T,                                  # (D, 4H)
        "w_hh_T": w_hh.T,                                  # (H, 4H)
        "b": (b_ih + b_hh)[None, :],                       # (1, 4H)
        "fc_w_T": fc_w.T,                                  # (T*H, P*H)
        "fc_b": fc_b[None, :],                             # (1, P*H)
        "conv_w_T": conv_w.reshape(P, P * H).T,            # (P*H, P)  (row-major i*H+k flatten,
                                                           #  matches nn.Unflatten(1, (P, H)))
        "conv_b": conv_b[None, :],                         # (1, P)
    }


def reference_forward(x, p):
    """Pure-JAX reference reproducing the PyTorch semantics (for verification)."""
    B, T, D = x.shape
    H = p["w_hh_T"].shape[0]
    h = jnp.zeros((B, H), jnp.float32)
    c = jnp.zeros((B, H), jnp.float32)
    outs = []
    for t in range(T):
        gates = x[:, t] @ p["w_ih_T"] + h @ p["w_hh_T"] + p["b"]
        i_g = jax.nn.sigmoid(gates[:, :H])
        f_g = jax.nn.sigmoid(gates[:, H:2 * H])
        g_g = jnp.tanh(gates[:, 2 * H:3 * H])
        o_g = jax.nn.sigmoid(gates[:, 3 * H:])
        c = f_g * c + i_g * g_g
        h = o_g * jnp.tanh(c)
        outs.append(h)
    seq = jnp.concatenate(outs, axis=1)                    # (B, T*H)
    fc = jnp.maximum(seq @ p["fc_w_T"] + p["fc_b"], 0.0)   # (B, P*H)
    return fc @ p["conv_w_T"] + p["conv_b"]                # (B, P)


if __name__ == "__main__":
    # Small, TPU-friendly shapes consistent with the module's forward.
    B, T, D, H, P = 4, 4, 32, 32, 2   # batch, history_length, input_size, hidden_size, prediction_length

    key = jax.random.PRNGKey(0)
    k_x, k_p = jax.random.split(key)
    x = jax.random.normal(k_x, (B, T, D), jnp.float32)     # (batch, seq, input_size), batch_first
    params = init_params(k_p, D, H, T, P)

    out = cfcc_lstm_forward(x, params)                     # f32 matmuls -> tight tolerance
    out = jax.block_until_ready(out)

    ref = reference_forward(x, params)
    assert out.shape == (B, P), out.shape
    np.testing.assert_allclose(np.asarray(out), np.asarray(ref), rtol=1e-5, atol=1e-5)

    print("KERNEL_OK")
</pallas_src>

<mosaic_0001>
module attributes {stable_mosaic.version = 11 : i64} {
  func.func @cfcc_lstm_kernel(%arg0: i32, %arg1: memref<4x8x128xf32, #tpu.memory_space<vmem>>, %arg2: memref<32x128xf32, #tpu.memory_space<vmem>>, %arg3: memref<128x128xf32, #tpu.memory_space<vmem>>, %arg4: memref<1x128xf32, #tpu.memory_space<vmem>>, %arg5: memref<128x128xf32, #tpu.memory_space<vmem>>, %arg6: memref<1x128xf32, #tpu.memory_space<vmem>>, %arg7: memref<8x128xf32, #tpu.memory_space<vmem>>) attributes {dimension_semantics = [#tpu.dimension_semantics<parallel>], iteration_bounds = array<i64: 2>, scalar_prefetch = 0 : i64, scratch_operands = 0 : i64, tpu.core_type = #tpu.core_type<tc>, window_params = [{transform_indices = @transform_0, window_bounds = array<i64: 4, 8, 128>}, {pipeline_mode = #tpu.pipeline_mode<synchronous>, transform_indices = @transform_1, window_bounds = array<i64: 32, 128>}, {pipeline_mode = #tpu.pipeline_mode<synchronous>, transform_indices = @transform_2, window_bounds = array<i64: 128, 128>}, {pipeline_mode = #tpu.pipeline_mode<synchronous>, transform_indices = @transform_3, window_bounds = array<i64: 1, 128>}, {pipeline_mode = #tpu.pipeline_mode<synchronous>, transform_indices = @transform_4, window_bounds = array<i64: 128, 128>}, {pipeline_mode = #tpu.pipeline_mode<synchronous>, transform_indices = @transform_5, window_bounds = array<i64: 1, 128>}, {transform_indices = @transform_6, window_bounds = array<i64: 8, 128>}]} {
    %c0 = arith.constant 0 : index
    %c0_0 = arith.constant 0 : index
    %0 = vector.load %arg2[%c0, %c0_0] : memref<32x128xf32, #tpu.memory_space<vmem>>, vector<32x128xf32>
    %1 = tpu.iota {dimensions = array<i32: 1>} : vector<8x128xi32>
    %c64_i32 = arith.constant 64 : i32
    %2 = vector.broadcast %c64_i32 : i32 to vector<8x128xi32>
    %3 = arith.cmpi sge, %1, %2 : vector<8x128xi32>
    %c96_i32 = arith.constant 96 : i32
    %4 = vector.broadcast %c96_i32 : i32 to vector<8x128xi32>
    %5 = arith.cmpi slt, %1, %4 : vector<8x128xi32>
    %6 = arith.andi %3, %5 : vector<8x128xi1>
    %cst = arith.constant 0.000000e+00 : f32
    %7 = vector.broadcast %cst : f32 to vector<8x32xf32>
    %cst_1 = arith.constant 0.000000e+00 : f32
    %8 = vector.broadcast %cst_1 : f32 to vector<8x32xf32>
    %cst_2 = arith.constant 0.000000e+00 : f32
    %9 = vector.broadcast %cst_2 : f32 to vector<8x128xf32>
    %c0_3 = arith.constant 0 : index
    %c0_4 = arith.constant 0 : index
    %c0_5 = arith.constant 0 : index
    %10 = vector.load %arg1[%c0_3, %c0_4, %c0_5] : memref<4x8x128xf32, #tpu.memory_space<vmem>>, vector<1x8x128xf32>
    %11 = vector.shape_cast %10 : vector<1x8x128xf32> to vector<8x128xf32>
    %cst_6 = arith.constant dense<0.000000e+00> : vector<8x128xf32>
    %12 = tpu.matmul %7, %0, %cst_6 {dimension_numbers = #tpu.dot_dimension_numbers<[1], [0], [0], [1], [0, 0, 1, 1], [], []>} : vector<8x32xf32>, vector<32x128xf32>, vector<8x128xf32> -> vector<8x128xf32>
    %13 = arith.addf %11, %12 : vector<8x128xf32>
    %cst_7 = arith.constant 5.000000e-01 : f32
    %14 = vector.broadcast %cst_7 : f32 to vector<8x128xf32>
    %15 = arith.mulf %14, %13 : vector<8x128xf32>
    %16 = arith.select %6, %13, %15 : vector<8x128xi1>, vector<8x128xf32>
    %17 = math.tanh %16 : vector<8x128xf32>
    %cst_8 = arith.constant 1.000000e+00 : f32
    %18 = vector.broadcast %cst_8 : f32 to vector<8x128xf32>
    %19 = arith.addf %17, %18 : vector<8x128xf32>
    %cst_9 = arith.constant 5.000000e-01 : f32
    %20 = vector.broadcast %cst_9 : f32 to vector<8x128xf32>
    %21 = arith.mulf %20, %19 : vector<8x128xf32>
    %22 = arith.select %6, %17, %21 : vector<8x128xi1>, vector<8x128xf32>
    %23 = vector.extract_strided_slice %22 {offsets = [0, 0], sizes = [8, 32], strides = [1, 1]} : vector<8x128xf32> to vector<8x32xf32>
    %24 = vector.extract_strided_slice %22 {offsets = [0, 32], sizes = [8, 32], strides = [1, 1]} : vector<8x128xf32> to vector<8x32xf32>
    %25 = vector.extract_strided_slice %22 {offsets = [0, 64], sizes = [8, 32], strides = [1, 1]} : vector<8x128xf32> to vector<8x32xf32>
    %26 = vector.extract_strided_slice %22 {offsets = [0, 96], sizes = [8, 32], strides = [1, 1]} : vector<8x128xf32> to vector<8x32xf32>
    %27 = arith.mulf %24, %8 : vector<8x32xf32>
    %28 = arith.mulf %23, %25 : vector<8x32xf32>
    %29 = arith.addf %27, %28 : vector<8x32xf32>
    %30 = math.tanh %29 : vector<8x32xf32>
    %31 = arith.mulf %26, %30 : vector<8x32xf32>
    %c0_10 = arith.constant 0 : index
    %c0_11 = arith.constant 0 : index
    %32 = vector.load %arg3[%c0_10, %c0_11] : memref<128x128xf32, #tpu.memory_space<vmem>>, vector<32x128xf32>
    %cst_12 = arith.constant dense<0.000000e+00> : vector<8x128xf32>
    %33 = tpu.matmul %31, %32, %cst_12 {dimension_numbers = #tpu.dot_dimension_numbers<[1], [0], [0], [1], [0, 0, 1, 1], [], []>} : vector<8x32xf32>, vector<32x128xf32>, vector<8x128xf32> -> vector<8x128xf32>
    %34 = arith.addf %9, %33 : vector<8x128xf32>
    %c1 = arith.constant 1 : index
    %c0_13 = arith.constant 0 : index
    %c0_14 = arith.constant 0 : index
    %35 = vector.load %arg1[%c1, %c0_13, %c0_14] : memref<4x8x128xf32, #tpu.memory_space<vmem>>, vector<1x8x128xf32>
    %36 = vector.shape_cast %35 : vector<1x8x128xf32> to vector<8x128xf32>
    %cst_15 = arith.constant dense<0.000000e+00> : vector<8x128xf32>
    %37 = tpu.matmul %31, %0, %cst_15 {dimension_numbers = #tpu.dot_dimension_numbers<[1], [0], [0], [1], [0, 0, 1, 1], [], []>} : vector<8x32xf32>, vector<32x128xf32>, vector<8x128xf32> -> vector<8x128xf32>
    %38 = arith.addf %36, %37 : vector<8x128xf32>
    %cst_16 = arith.constant 5.000000e-01 : f32
    %39 = vector.broadcast %cst_16 : f32 to vector<8x128xf32>
    %40 = arith.mulf %39, %38 : vector<8x128xf32>
    %41 = arith.select %6, %38, %40 : vector<8x128xi1>, vector<8x128xf32>
    %42 = math.tanh %41 : vector<8x128xf32>
    %cst_17 = arith.constant 1.000000e+00 : f32
    %43 = vector.broadcast %cst_17 : f32 to vector<8x128xf32>
    %44 = arith.addf %42, %43 : vector<8x128xf32>
    %cst_18 = arith.constant 5.000000e-01 : f32
    %45 = vector.broadcast %cst_18 : f32 to vector<8x128xf32>
    %46 = arith.mulf %45, %44 : vector<8x128xf32>
    %47 = arith.select %6, %42, %46 : vector<8x128xi1>, vector<8x128xf32>
    %48 = vector.extract_strided_slice %47 {offsets = [0, 0], sizes = [8, 32], strides = [1, 1]} : vector<8x128xf32> to vector<8x32xf32>
    %49 = vector.extract_strided_slice %47 {offsets = [0, 32], sizes = [8, 32], strides = [1, 1]} : vector<8x128xf32> to vector<8x32xf32>
    %50 = vector.extract_strided_slice %47 {offsets = [0, 64], sizes = [8, 32], strides = [1, 1]} : vector<8x128xf32> to vector<8x32xf32>
    %51 = vector.extract_strided_slice %47 {offsets = [0, 96], sizes = [8, 32], strides = [1, 1]} : vector<8x128xf32> to vector<8x32xf32>
    %52 = arith.mulf %49, %29 : vector<8x32xf32>
    %53 = arith.mulf %48, %50 : vector<8x32xf32>
    %54 = arith.addf %52, %53 : vector<8x32xf32>
    %55 = math.tanh %54 : vector<8x32xf32>
    %56 = arith.mulf %51, %55 : vector<8x32xf32>
    %c32 = arith.constant 32 : index
    %c0_19 = arith.constant 0 : index
    %57 = vector.load %arg3[%c32, %c0_19] : memref<128x128xf32, #tpu.memory_space<vmem>>, vector<32x128xf32>
    %cst_20 = arith.constant dense<0.000000e+00> : vector<8x128xf32>
    %58 = tpu.matmul %56, %57, %cst_20 {dimension_numbers = #tpu.dot_dimension_numbers<[1], [0], [0], [1], [0, 0, 1, 1], [], []>} : vector<8x32xf32>, vector<32x128xf32>, vector<8x128xf32> -> vector<8x128xf32>
    %59 = arith.addf %34, %58 : vector<8x128xf32>
    %c2 = arith.constant 2 : index
    %c0_21 = arith.constant 0 : index
    %c0_22 = arith.constant 0 : index
    %60 = vector.load %arg1[%c2, %c0_21, %c0_22] : memref<4x8x128xf32, #tpu.memory_space<vmem>>, vector<1x8x128xf32>
    %61 = vector.shape_cast %60 : vector<1x8x128xf32> to vector<8x128xf32>
    %cst_23 = arith.constant dense<0.000000e+00> : vector<8x128xf32>
    %62 = tpu.matmul %56, %0, %cst_23 {dimension_numbers = #tpu.dot_dimension_numbers<[1], [0], [0], [1], [0, 0, 1, 1], [], []>} : vector<8x32xf32>, vector<32x128xf32>, vector<8x128xf32> -> vector<8x128xf32>
    %63 = arith.addf %61, %62 : vector<8x128xf32>
    %cst_24 = arith.constant 5.000000e-01 : f32
    %64 = vector.broadcast %cst_24 : f32 to vector<8x128xf32>
    %65 = arith.mulf %64, %63 : vector<8x128xf32>
    %66 = arith.select %6, %63, %65 : vector<8x128xi1>, vector<8x128xf32>
    %67 = math.tanh %66 : vector<8x128xf32>
    %cst_25 = arith.constant 1.000000e+00 : f32
    %68 = vector.broadcast %cst_25 : f32 to vector<8x128xf32>
    %69 = arith.addf %67, %68 : vector<8x128xf32>
    %cst_26 = arith.constant 5.000000e-01 : f32
    %70 = vector.broadcast %cst_26 : f32 to vector<8x128xf32>
    %71 = arith.mulf %70, %69 : vector<8x128xf32>
    %72 = arith.select %6, %67, %71 : vector<8x128xi1>, vector<8x128xf32>
    %73 = vector.extract_strided_slice %72 {offsets = [0, 0], sizes = [8, 32], strides = [1, 1]} : vector<8x128xf32> to vector<8x32xf32>
    %74 = vector.extract_strided_slice %72 {offsets = [0, 32], sizes = [8, 32], strides = [1, 1]} : vector<8x128xf32> to vector<8x32xf32>
    %75 = vector.extract_strided_slice %72 {offsets = [0, 64], sizes = [8, 32], strides = [1, 1]} : vector<8x128xf32> to vector<8x32xf32>
    %76 = vector.extract_strided_slice %72 {offsets = [0, 96], sizes = [8, 32], strides = [1, 1]} : vector<8x128xf32> to vector<8x32xf32>
    %77 = arith.mulf %74, %54 : vector<8x32xf32>
    %78 = arith.mulf %73, %75 : vector<8x32xf32>
    %79 = arith.addf %77, %78 : vector<8x32xf32>
    %80 = math.tanh %79 : vector<8x32xf32>
    %81 = arith.mulf %76, %80 : vector<8x32xf32>
    %c64 = arith.constant 64 : index
    %c0_27 = arith.constant 0 : index
    %82 = vector.load %arg3[%c64, %c0_27] : memref<128x128xf32, #tpu.memory_space<vmem>>, vector<32x128xf32>
    %cst_28 = arith.constant dense<0.000000e+00> : vector<8x128xf32>
    %83 = tpu.matmul %81, %82, %cst_28 {dimension_numbers = #tpu.dot_dimension_numbers<[1], [0], [0], [1], [0, 0, 1, 1], [], []>} : vector<8x32xf32>, vector<32x128xf32>, vector<8x128xf32> -> vector<8x128xf32>
    %84 = arith.addf %59, %83 : vector<8x128xf32>
    %c3 = arith.constant 3 : index
    %c0_29 = arith.constant 0 : index
    %c0_30 = arith.constant 0 : index
    %85 = vector.load %arg1[%c3, %c0_29, %c0_30] : memref<4x8x128xf32, #tpu.memory_space<vmem>>, vector<1x8x128xf32>
    %86 = vector.shape_cast %85 : vector<1x8x128xf32> to vector<8x128xf32>
    %cst_31 = arith.constant dense<0.000000e+00> : vector<8x128xf32>
    %87 = tpu.matmul %81, %0, %cst_31 {dimension_numbers = #tpu.dot_dimension_numbers<[1], [0], [0], [1], [0, 0, 1, 1], [], []>} : vector<8x32xf32>, vector<32x128xf32>, vector<8x128xf32> -> vector<8x128xf32>
    %88 = arith.addf %86, %87 : vector<8x128xf32>
    %cst_32 = arith.constant 5.000000e-01 : f32
    %89 = vector.broadcast %cst_32 : f32 to vector<8x128xf32>
    %90 = arith.mulf %89, %88 : vector<8x128xf32>
    %91 = arith.select %6, %88, %90 : vector<8x128xi1>, vector<8x128xf32>
    %92 = math.tanh %91 : vector<8x128xf32>
    %cst_33 = arith.constant 1.000000e+00 : f32
    %93 = vector.broadcast %cst_33 : f32 to vector<8x128xf32>
    %94 = arith.addf %92, %93 : vector<8x128xf32>
    %cst_34 = arith.constant 5.000000e-01 : f32
    %95 = vector.broadcast %cst_34 : f32 to vector<8x128xf32>
    %96 = arith.mulf %95, %94 : vector<8x128xf32>
    %97 = arith.select %6, %92, %96 : vector<8x128xi1>, vector<8x128xf32>
    %98 = vector.extract_strided_slice %97 {offsets = [0, 0], sizes = [8, 32], strides = [1, 1]} : vector<8x128xf32> to vector<8x32xf32>
    %99 = vector.extract_strided_slice %97 {offsets = [0, 32], sizes = [8, 32], strides = [1, 1]} : vector<8x128xf32> to vector<8x32xf32>
    %100 = vector.extract_strided_slice %97 {offsets = [0, 64], sizes = [8, 32], strides = [1, 1]} : vector<8x128xf32> to vector<8x32xf32>
    %101 = vector.extract_strided_slice %97 {offsets = [0, 96], sizes = [8, 32], strides = [1, 1]} : vector<8x128xf32> to vector<8x32xf32>
    %102 = arith.mulf %99, %79 : vector<8x32xf32>
    %103 = arith.mulf %98, %100 : vector<8x32xf32>
    %104 = arith.addf %102, %103 : vector<8x32xf32>
    %105 = math.tanh %104 : vector<8x32xf32>
    %106 = arith.mulf %101, %105 : vector<8x32xf32>
    %c96 = arith.constant 96 : index
    %c0_35 = arith.constant 0 : index
    %107 = vector.load %arg3[%c96, %c0_35] : memref<128x128xf32, #tpu.memory_space<vmem>>, vector<32x128xf32>
    %cst_36 = arith.constant dense<0.000000e+00> : vector<8x128xf32>
    %108 = tpu.matmul %106, %107, %cst_36 {dimension_numbers = #tpu.dot_dimension_numbers<[1], [0], [0], [1], [0, 0, 1, 1], [], []>} : vector<8x32xf32>, vector<32x128xf32>, vector<8x128xf32> -> vector<8x128xf32>
    %109 = arith.addf %84, %108 : vector<8x128xf32>
    %c0_37 = arith.constant 0 : index
    %c0_38 = arith.constant 0 : index
    %110 = vector.load %arg4[%c0_37, %c0_38] : memref<1x128xf32, #tpu.memory_space<vmem>>, vector<1x128xf32>
    %111 = vector.broadcast %110 : vector<1x128xf32> to vector<8x128xf32>
    %112 = arith.addf %109, %111 : vector<8x128xf32>
    %cst_39 = arith.constant 0.000000e+00 : f32
    %113 = vector.broadcast %cst_39 : f32 to vector<8x128xf32>
    %114 = arith.maximumf %112, %113 : vector<8x128xf32>
    %c0_40 = arith.constant 0 : index
    %c0_41 = arith.constant 0 : index
    %115 = vector.load %arg5[%c0_40, %c0_41] : memref<128x128xf32, #tpu.memory_space<vmem>>, vector<128x128xf32>
    %cst_42 = arith.constant dense<0.000000e+00> : vector<8x128xf32>
    %116 = tpu.matmul %114, %115, %cst_42 {dimension_numbers = #tpu.dot_dimension_numbers<[1], [0], [0], [1], [0, 0, 1, 1], [], []>} : vector<8x128xf32>, vector<128x128xf32>, vector<8x128xf32> -> vector<8x128xf32>
    %c0_43 = arith.constant 0 : index
    %c0_44 = arith.constant 0 : index
    %117 = vector.load %arg6[%c0_43, %c0_44] : memref<1x128xf32, #tpu.memory_space<vmem>>, vector<1x128xf32>
    %118 = vector.broadcast %117 : vector<1x128xf32> to vector<8x128xf32>
    %119 = arith.addf %116, %118 : vector<8x128xf32>
    %c0_45 = arith.constant 0 : index
    %c0_46 = arith.constant 0 : index
    %120 = vector.load %arg7[%c0_45, %c0_46] : memref<8x128xf32, #tpu.memory_space<vmem>>, vector<8x128xf32>
    tpu.vector_store %arg7[%c0_45, %c0_46], %119 {strides = array<i32>} : memref<8x128xf32, #tpu.memory_space<vmem>>, vector<8x128xf32>,
    return
  }
  func.func @transform_0(%arg0: i32) -> (i32, i32, i32) {
    %c0_i32 = arith.constant 0 : i32
    %c0_i32_0 = arith.constant 0 : i32
    %c0_i32_1 = arith.constant 0 : i32
    return %c0_i32, %arg0, %c0_i32_0 : i32, i32, i32
  }
  func.func @transform_1(%arg0: i32) -> (i32, i32) {
    %c0_i32 = arith.constant 0 : i32
    %c0_i32_0 = arith.constant 0 : i32
    %c0_i32_1 = arith.constant 0 : i32
    return %c0_i32, %c0_i32_0 : i32, i32
  }
  func.func @transform_2(%arg0: i32) -> (i32, i32) {
    %c0_i32 = arith.constant 0 : i32
    %c0_i32_0 = arith.constant 0 : i32
    %c0_i32_1 = arith.constant 0 : i32
    return %c0_i32, %c0_i32_0 : i32, i32
  }
  func.func @transform_3(%arg0: i32) -> (i32, i32) {
    %c0_i32 = arith.constant 0 : i32
    %c0_i32_0 = arith.constant 0 : i32
    %c0_i32_1 = arith.constant 0 : i32
    return %c0_i32, %c0_i32_0 : i32, i32
  }
  func.func @transform_4(%arg0: i32) -> (i32, i32) {
    %c0_i32 = arith.constant 0 : i32
    %c0_i32_0 = arith.constant 0 : i32
    %c0_i32_1 = arith.constant 0 : i32
    return %c0_i32, %c0_i32_0 : i32, i32
  }
  func.func @transform_5(%arg0: i32) -> (i32, i32) {
    %c0_i32 = arith.constant 0 : i32
    %c0_i32_0 = arith.constant 0 : i32
    %c0_i32_1 = arith.constant 0 : i32
    return %c0_i32, %c0_i32_0 : i32, i32
  }
  func.func @transform_6(%arg0: i32) -> (i32, i32) {
    %c0_i32 = arith.constant 0 : i32
    %c0_i32_0 = arith.constant 0 : i32
    return %arg0, %c0_i32 : i32, i32
  }
}

</mosaic_0001>

<llo_original>
// kernel: tpu_custom_call.1
$region0: #{tpu_custom_call.1}
  #allocation0 [shape = 'u32[]', space=smem, size = 0x4, offset = 0x4, fixed_abs, tag = 'smem constant byte address 0x4 - core index']
  #allocation1 [shape = 'u32[144,128]{1,0:T(1,128)}', space=vmem, size = 0x12000, scoped, tag = 'internal scratch']
  %s0 = inlined_call_operand.hbm [shape: f32[4,16,128], index: 0, kind: input, shape index: {}]
  %s1 = inlined_call_operand.hbm [shape: f32[32,128], index: 1, kind: input, shape index: {}]
  %s2 = inlined_call_operand.hbm [shape: f32[128,128], index: 2, kind: input, shape index: {}]
  %s3 = inlined_call_operand.vmem [shape: f32[1,128], index: 3, kind: input, shape index: {}]
  %s4 = inlined_call_operand.hbm [shape: f32[128,128], index: 4, kind: input, shape index: {}]
  %s5 = inlined_call_operand.vmem [shape: f32[1,128], index: 5, kind: input, shape index: {}]
  %s6 = inlined_call_operand.hbm [shape: f32[16,128], index: 6, kind: output, shape index: {}]
  %s7 = sld [smem:[#allocation0]]
  $region73: #{tpu_custom_call.1} parent=0
    _
  %s9 = ssub.s32 1, %s7
  %s10 = scalar_select 0, %s9, %s7
  $region1: #{tpu_custom_call.1} parent=0
    #allocation2 [shape = 'u8[32768]{0}', space=vmem, size = 0x8000, scoped, tag = 'input window, operand 0']
    #allocation3 [shape = 's32[2]{0}', space=sflag, size = 0x8, scoped, tag = 'scoped memory for tpu_custom_call.1']
    #allocation4 [shape = 's32[2]{0}', space=sflag, size = 0x8, scoped, tag = 'scoped memory for tpu_custom_call.1']
    #allocation5 [shape = 'u8[16384]{0}', space=vmem, size = 0x4000, scoped, tag = 'input window, operand 1, single buffered']
    #allocation6 [shape = 's32[1]{0}', space=sflag, size = 0x4, scoped, tag = 'scoped memory for tpu_custom_call.1']
    #allocation7 [shape = 'u8[65536]{0}', space=vmem, size = 0x10000, scoped, tag = 'input window, operand 2, single buffered']
    #allocation8 [shape = 'u8[65536]{0}', space=vmem, size = 0x10000, scoped, tag = 'input window, operand 4, single buffered']
    #allocation9 [shape = 's32[1]{0}', space=sflag, size = 0x4, scoped, tag = 'scoped memory for tpu_custom_call.1']
    #allocation10 [shape = 'u8[8192]{0}', space=vmem, size = 0x2000, scoped, tag = 'output window, operand 0']
    %11 = vsyncpa [#allocation3], 0
    %s12 = scalar_lea.sflag [#allocation3], 1
    %13 = vsyncpa %s12, 0
    %14 = vsyncpa [#allocation6], 0
    %15 = vsyncpa [#allocation9], 0
    %16 = vsyncpa [#allocation4], 0
    %s17 = scalar_lea.sflag [#allocation4], 1
    %18 = vsyncpa %s17, 0
    loop: start=0, step=1, limit=4
    $region2: #{tpu_custom_call.1} parent=1 // loop_pre_header
      _
    $region3: #{tpu_custom_call.1} parent=1 // loop_header
      %s20 = sphi 0, %s24
      %p21 = scmp.ge.s32.totalorder %s20, 4
      %s30 = sphi 0, %s32
      %s33 = sphi 0, %s30
      %s34 = sphi 0, %s33
      %s50 = sphi 0, %s34
      %s54 = sphi 0, %s54
      %s56 = sphi 0, %s54
      %s57 = sphi 0, %s56
      %s71 = sphi 0, %s57
      %s75 = sphi 0, %s75
      %s77 = sphi 0, %s75
      %s78 = sphi 0, %s77
      %s92 = sphi 0, %s78
      %s96 = sphi 0, %s96
      %s98 = sphi 0, %s96
      %s99 = sphi 0, %s98
      %s113 = sphi 0, %s99
      %s117 = sphi 0, %s117
      %s119 = sphi 0, %s117
      %s120 = sphi 0, %s119
      %s134 = sphi 0, %s120
      %s138 = sphi 0, %s138
      %s140 = sphi 0, %s138
      %s141 = sphi 0, %s140
      %s155 = sphi 0, %s141
      %s161 = sphi 0, %s163
      %s164 = sphi 0, %s161
      %s165 = sphi 0, %s164
      %s181 = sphi 0, %s165
    $region4: #{tpu_custom_call.1} parent=1 // loop_header_branch
      %23 = sbr.rel (%p21) target = $region8
    $region5: #{tpu_custom_call.1} parent=1 // loop_body
      %s25 = ssub.s32 %s20, 1
      %s26 = ssub.s32 %s20, 2
      %s27 = sadd.s32 %s20, 1
      %s28 = ssub.s32 %s20, %s27
      %p29 = scmp.eq.s32.totalorder %s28, 0
      %s31 = sadd.s32 %s30, 1
      %s32 = scalar_select %p29, %s30, %s31
      %p35 = pneg %p29
      %p36 = scmp.eq.s32.totalorder %s20, 1
      %p37 = por %p35, %p36
      %p38 = scmp.ne.s32.totalorder %s30, %s33
      %p39 = scmp.eq.s32.totalorder %s20, 0
      %p40 = por %p38, %p39
      %p41 = scmp.ne.s32.totalorder %s30, %s33
      %p42 = scmp.eq.s32.totalorder %s25, 1
      %p43 = por %p41, %p42
      %p44 = scmp.ne.s32.totalorder %s33, %s34
      %p45 = scmp.eq.s32.totalorder %s25, 0
      %p46 = por %p44, %p45
      %p47 = scmp.ne.s32.totalorder %s33, %s34
      %p48 = scmp.eq.s32.totalorder %s26, 1
      %p49 = por %p47, %p48
      %p51 = scmp.ne.s32.totalorder %s34, %s50
      %p52 = scmp.eq.s32.totalorder %s26, 0
      %p53 = por %p51, %p52
      %s55 = sadd.s32 %s54, 1
      %p58 = scmp.eq.s32.totalorder %s20, 1
      %p59 = scmp.ne.s32.totalorder %s54, %s56
      %p60 = scmp.eq.s32.totalorder %s20, 0
      %p61 = por %p59, %p60
      %p62 = scmp.ne.s32.totalorder %s54, %s56
      %p63 = scmp.eq.s32.totalorder %s25, 1
      %p64 = por %p62, %p63
      %p65 = scmp.ne.s32.totalorder %s56, %s57
      %p66 = scmp.eq.s32.totalorder %s25, 0
      %p67 = por %p65, %p66
      %p68 = scmp.ne.s32.totalorder %s56, %s57
      %p69 = scmp.eq.s32.totalorder %s26, 1
      %p70 = por %p68, %p69
      %p72 = scmp.ne.s32.totalorder %s57, %s71
      %p73 = scmp.eq.s32.totalorder %s26, 0
      %p74 = por %p72, %p73
      %s76 = sadd.s32 %s75, 1
      %p79 = scmp.eq.s32.totalorder %s20, 1
      %p80 = scmp.ne.s32.totalorder %s75, %s77
      %p81 = scmp.eq.s32.totalorder %s20, 0
      %p82 = por %p80, %p81
      %p83 = scmp.ne.s32.totalorder %s75, %s77
      %p84 = scmp.eq.s32.totalorder %s25, 1
      %p85 = por %p83, %p84
      %p86 = scmp.ne.s32.totalorder %s77, %s78
      %p87 = scmp.eq.s32.totalorder %s25, 0
      %p88 = por %p86, %p87
      %p89 = scmp.ne.s32.totalorder %s77, %s78
      %p90 = scmp.eq.s32.totalorder %s26, 1
      %p91 = por %p89, %p90
      %p93 = scmp.ne.s32.totalorder %s78, %s92
      %p94 = scmp.eq.s32.totalorder %s26, 0
      %p95 = por %p93, %p94
      %s97 = sadd.s32 %s96, 1
      %p100 = scmp.eq.s32.totalorder %s20, 1
      %p101 = scmp.ne.s32.totalorder %s96, %s98
      %p102 = scmp.eq.s32.totalorder %s20, 0
      %p103 = por %p101, %p102
      %p104 = scmp.ne.s32.totalorder %s96, %s98
      %p105 = scmp.eq.s32.totalorder %s25, 1
      %p106 = por %p104, %p105
      %p107 = scmp.ne.s32.totalorder %s98, %s99
      %p108 = scmp.eq.s32.totalorder %s25, 0
      %p109 = por %p107, %p108
      %p110 = scmp.ne.s32.totalorder %s98, %s99
      %p111 = scmp.eq.s32.totalorder %s26, 1
      %p112 = por %p110, %p111
      %p114 = scmp.ne.s32.totalorder %s99, %s113
      %p115 = scmp.eq.s32.totalorder %s26, 0
      %p116 = por %p114, %p115
      %s118 = sadd.s32 %s117, 1
      %p121 = scmp.eq.s32.totalorder %s20, 1
      %p122 = scmp.ne.s32.totalorder %s117, %s119
      %p123 = scmp.eq.s32.totalorder %s20, 0
      %p124 = por %p122, %p123
      %p125 = scmp.ne.s32.totalorder %s117, %s119
      %p126 = scmp.eq.s32.totalorder %s25, 1
      %p127 = por %p125, %p126
      %p128 = scmp.ne.s32.totalorder %s119, %s120
      %p129 = scmp.eq.s32.totalorder %s25, 0
      %p130 = por %p128, %p129
      %p131 = scmp.ne.s32.totalorder %s119, %s120
      %p132 = scmp.eq.s32.totalorder %s26, 1
      %p133 = por %p131, %p132
      %p135 = scmp.ne.s32.totalorder %s120, %s134
      %p136 = scmp.eq.s32.totalorder %s26, 0
      %p137 = por %p135, %p136
      %s139 = sadd.s32 %s138, 1
      %p142 = scmp.eq.s32.totalorder %s20, 1
      %p143 = scmp.ne.s32.totalorder %s138, %s140
      %p144 = scmp.eq.s32.totalorder %s20, 0
      %p145 = por %p143, %p144
      %p146 = scmp.ne.s32.totalorder %s138, %s140
      %p147 = scmp.eq.s32.totalorder %s25, 1
      %p148 = por %p146, %p147
      %p149 = scmp.ne.s32.totalorder %s140, %s141
      %p150 = scmp.eq.s32.totalorder %s25, 0
      %p151 = por %p149, %p150
      %p152 = scmp.ne.s32.totalorder %s140, %s141
      %p153 = scmp.eq.s32.totalorder %s26, 1
      %p154 = por %p152, %p153
      %p156 = scmp.ne.s32.totalorder %s141, %s155
      %p157 = scmp.eq.s32.totalorder %s26, 0
      %p158 = por %p156, %p157
      %s159 = ssub.s32 %s20, %s27
      %p160 = scmp.eq.s32.totalorder %s159, 0
      %s162 = sadd.s32 %s161, 1
      %s163 = scalar_select %p160, %s161, %s162
      %p166 = pneg %p160
      %p167 = scmp.eq.s32.totalorder %s20, 1
      %p168 = por %p166, %p167
      %p169 = scmp.ne.s32.totalorder %s161, %s164
      %p170 = scmp.eq.s32.totalorder %s20, 0
      %p171 = por %p169, %p170
      %p172 = scmp.ne.s32.totalorder %s161, %s164
      %p173 = scmp.eq.s32.totalorder %s25, 1
      %p174 = por %p172, %p173
      %p175 = scmp.ne.s32.totalorder %s164, %s165
      %p176 = scmp.eq.s32.totalorder %s25, 0
      %p177 = por %p175, %p176
      %p178 = scmp.ne.s32.totalorder %s164, %s165
      %p179 = scmp.eq.s32.totalorder %s26, 1
      %p180 = por %p178, %p179
      %p182 = scmp.ne.s32.totalorder %s165, %s181
      %p183 = scmp.eq.s32.totalorder %s26, 0
      %p184 = por %p182, %p183
      %p185 = scmp.le.s32.totalorder 1, %s20
      %p186 = scmp.lt.s32.totalorder %s20, 3
      %p187 = pnand %p185, %p186
      %p188 = pneg %p187
      // Predicated region
      $region9: #{tpu_custom_call.1} parent=5 // pred_check
        _
      $region10: #{tpu_custom_call.1} parent=5 // pred_check_branch
        %190 = sbr.rel (%p187) target = $region12
      $region11: #{tpu_custom_call.1} parent=5 // pred_region
        %s191 = ssub.s32 %s20, 1
        // Predicated region
        $region13: #{tpu_custom_call.1} parent=11 // pred_check
          %p192 = pneg %p67
        $region14: #{tpu_custom_call.1} parent=11 // pred_check_branch
          %194 = sbr.rel (%p192) target = $region16
        $region15: #{tpu_custom_call.1} parent=11 // pred_region
          %s196 = ssub.s32 512, 512
          %197 = vsyncadd [#allocation6], %s196
          %s198 = sshll.u32 [#allocation5], 4
          %s199 = int_to_ptr.vmem [resolvable:$true] %s198
          %204 = dma.hbm_to_vmem [thread:$0]  %s1, 512, %s199, [#allocation6], 128, 128, 8
        $region16: #{tpu_custom_call.1} parent=11 // pred_fallthru
          _
        // Predicated region
        $region17: #{tpu_custom_call.1} parent=11 // pred_check
          %p205 = pneg %p88
        $region18: #{tpu_custom_call.1} parent=11 // pred_check_branch
          %207 = sbr.rel (%p205) target = $region20
        $region19: #{tpu_custom_call.1} parent=11 // pred_region
          %s209 = ssub.s32 2048, 2048
          %210 = vsyncadd [#allocation6], %s209
          %s211 = sshll.u32 [#allocation7], 4
          %s212 = int_to_ptr.vmem [resolvable:$true] %s211
          %217 = dma.hbm_to_vmem [thread:$0]  %s2, 2048, %s212, [#allocation6], 128, 128, 8
        $region20: #{tpu_custom_call.1} parent=11 // pred_fallthru
          _
        // Predicated region
        $region21: #{tpu_custom_call.1} parent=11 // pred_check
          %p218 = pneg %p109
        $region22: #{tpu_custom_call.1} parent=11 // pred_check_branch
          %220 = sbr.rel (%p218) target = $region24
        $region23: #{tpu_custom_call.1} parent=11 // pred_region
          _
        $region24: #{tpu_custom_call.1} parent=11 // pred_fallthru
          _
        // Predicated region
        $region25: #{tpu_custom_call.1} parent=11 // pred_check
          %p221 = pneg %p130
        $region26: #{tpu_custom_call.1} parent=11 // pred_check_branch
          %223 = sbr.rel (%p221) target = $region28
        $region27: #{tpu_custom_call.1} parent=11 // pred_region
          %s225 = ssub.s32 2048, 2048
          %226 = vsyncadd [#allocation9], %s225
          %s227 = sshll.u32 [#allocation8], 4
          %s228 = int_to_ptr.vmem [resolvable:$true] %s227
          %233 = dma.hbm_to_vmem [thread:$0]  %s4, 2048, %s228, [#allocation9], 128, 128, 8
        $region28: #{tpu_custom_call.1} parent=11 // pred_fallthru
          _
        // Predicated region
        $region29: #{tpu_custom_call.1} parent=11 // pred_check
          %p234 = pneg %p151
        $region30: #{tpu_custom_call.1} parent=11 // pred_check_branch
          %236 = sbr.rel (%p234) target = $region32
        $region31: #{tpu_custom_call.1} parent=11 // pred_region
          _
        $region32: #{tpu_custom_call.1} parent=11 // pred_fallthru
          _
      $region12: #{tpu_custom_call.1} parent=5 // pred_fallthru
        _
      %p237 = scmp.lt.s32.totalorder %s20, 2
      // Predicated region
      $region33: #{tpu_custom_call.1} parent=5 // pred_check
        %p238 = pneg %p237
      $region34: #{tpu_custom_call.1} parent=5 // pred_check_branch
        %240 = sbr.rel (%p238) target = $region36
      $region35: #{tpu_custom_call.1} parent=5 // pred_region
        // Predicated region
        $region37: #{tpu_custom_call.1} parent=35 // pred_check
          %p241 = pneg %p40
        $region38: #{tpu_custom_call.1} parent=35 // pred_check_branch
          %243 = sbr.rel (%p241) target = $region40
        $region39: #{tpu_custom_call.1} parent=35 // pred_region
          %s244 = sand.u32 %s30, 1
          %s245 = scalar_lea.sflag [#allocation3], %s244
          %s246 = sand.u32 %s30, 1
          %s247 = smul.addr %s246, 32
          %s248 = scalar_lea.vmem [#allocation2], %s247
          %s250 = ssub.s32 512, 512
          %251 = vsyncadd %s245, %s250
          %s252 = smul.addr %s20, 128
          %s253 = scalar_lea.hbm %s0, %s252
          %s254 = sshll.u32 %s248, 4
          %s255 = int_to_ptr.vmem [resolvable:$true] %s254
          %260 = dma.hbm_to_vmem [thread:$0]  %s253, 512, %s255, %s245, 256, 128, 8
        $region40: #{tpu_custom_call.1} parent=35 // pred_fallthru
          _
      $region36: #{tpu_custom_call.1} parent=5 // pred_fallthru
        _
      %p261 = scmp.le.s32.totalorder 1, %s20
      %p262 = scmp.lt.s32.totalorder %s20, 3
      %p263 = pnand %p261, %p262
      %p264 = pneg %p263
      // Predicated region
      $region41: #{tpu_custom_call.1} parent=5 // pred_check
        _
      $region42: #{tpu_custom_call.1} parent=5 // pred_check_branch
        %266 = sbr.rel (%p263) target = $region44
      $region43: #{tpu_custom_call.1} parent=5 // pred_region
        %s267 = ssub.s32 %s20, 1
        %s268 = sand.u32 %s33, 1
        %s269 = scalar_lea.sflag [#allocation3], %s268
        %s270 = sand.u32 %s33, 1
        %s271 = smul.addr %s270, 32
        %s272 = scalar_lea.vmem [#allocation2], %s271
        // Predicated region
        $region45: #{tpu_custom_call.1} parent=43 // pred_check
          %p273 = pneg %p46
        $region46: #{tpu_custom_call.1} parent=43 // pred_check_branch
          %275 = sbr.rel (%p273) target = $region48
        $region47: #{tpu_custom_call.1} parent=43 // pred_region
          %276 = dma.done %s269, 512
        $region48: #{tpu_custom_call.1} parent=43 // pred_fallthru
          _
        // Predicated region
        $region49: #{tpu_custom_call.1} parent=43 // pred_check
          %p277 = pneg %p67
        $region50: #{tpu_custom_call.1} parent=43 // pred_check_branch
          %279 = sbr.rel (%p277) target = $region52
        $region51: #{tpu_custom_call.1} parent=43 // pred_region
          %280 = dma.done [#allocation6], 512
        $region52: #{tpu_custom_call.1} parent=43 // pred_fallthru
          _
        // Predicated region
        $region53: #{tpu_custom_call.1} parent=43 // pred_check
          %p281 = pneg %p88
        $region54: #{tpu_custom_call.1} parent=43 // pred_check_branch
          %283 = sbr.rel (%p281) target = $region56
        $region55: #{tpu_custom_call.1} parent=43 // pred_region
          %284 = dma.done [#allocation6], 2048
        $region56: #{tpu_custom_call.1} parent=43 // pred_fallthru
          _
        // Predicated region
        $region57: #{tpu_custom_call.1} parent=43 // pred_check
          %p285 = pneg %p130
        $region58: #{tpu_custom_call.1} parent=43 // pred_check_branch
          %287 = sbr.rel (%p285) target = $region60
        $region59: #{tpu_custom_call.1} parent=43 // pred_region
          %288 = dma.done [#allocation9], 2048
        $region60: #{tpu_custom_call.1} parent=43 // pred_fallthru
          _
        %s289 = sand.u32 %s33, 1
        %s290 = scalar_lea.sflag [#allocation3], %s289
        %s291 = sand.u32 %s33, 1
        %s292 = smul.addr %s291, 32
        %s293 = scalar_lea.vmem [#allocation2], %s292
        %p294 = pneg %p46
        %p295 = pneg %p43
        %p296 = pneg %p67
        %p297 = pneg %p64
        %p298 = pneg %p88
        %p299 = pneg %p85
        %p300 = pneg %p109
        %p301 = pneg %p106
        %p302 = pneg %p130
        %p303 = pneg %p127
        %p304 = pneg %p151
        %p305 = pneg %p148
        %p306 = pneg %p177
        %p307 = pneg %p174
        %s308 = sand.u32 %s164, 1
        %s309 = scalar_lea.sflag [#allocation4], %s308
        %s310 = sand.u32 %s164, 1
        %s311 = smul.addr %s310, 8
        %s312 = scalar_lea.vmem [#allocation10], %s311
        %v313 = vld [vmem:[#allocation5] sm:$0xff]
        %v314 = vld [vmem:[#allocation5 + $0x8] sm:$0xff]
        %v315 = vld [vmem:[#allocation5 + $0x10] sm:$0xff]
        %v316 = vld [vmem:[#allocation5 + $0x18] sm:$0xff]
        %v317 = vlaneseq
        %v318 = vand.u32 %v317, 127
        %vm319 = vcmp.ge.s32.totalorder %v318, 64
        %vm320 = vcmp.lt.s32.totalorder %v318, 96
        %vm321 = vmand %vm319, %vm320
        %v322 = vld [vmem:[%s272] sm:$0xff]
        %vm323 = vcmask 261120
        %v325 = vsel %vm323, 0.0, 0
        %327 = vmatprep.subr.mxu0 0.0
        %328 = vmatpush1.msra.mxu0 0.0
        %329 = vmatprep.subr.mxu0 0.0
        %330 = vmatpush1.msra.mxu0 0.0
        %331 = vmatprep.subr.mxu0 0.0
        %332 = vmatpush1.msra.mxu0 0.0
        %333 = vmatprep.subr.mxu0 0.0
        %334 = vmatpush1.msra.mxu0 0.0
        %335 = vmatprep.subr.mxu0 0.0
        %336 = vmatpush1.msra.mxu0 0.0
        %337 = vmatprep.subr.mxu0 0.0
        %338 = vmatpush1.msra.mxu0 0.0
        %339 = vmatprep.subr.mxu0 0.0
        %340 = vmatpush1.msra.mxu0 0.0
        %341 = vmatprep.subr.mxu0 0.0
        %342 = vmatpush1.msra.mxu0 0.0
        %343 = vmatprep.subr.mxu0 0.0
        %344 = vmatpush1.msra.mxu0 0.0
        %345 = vmatprep.subr.mxu0 0.0
        %346 = vmatpush1.msra.mxu0 0.0
        %347 = vmatprep.subr.mxu0 0.0
        %348 = vmatpush1.msra.mxu0 0.0
        %349 = vmatprep.subr.mxu0 0.0
        %350 = vmatpush1.msra.mxu0 0.0
        %351 = vmatprep.subr.mxu0 0.0
        %352 = vmatpush1.msra.mxu0 %v316
        %353 = vmatprep.subr.mxu0 0.0
        %354 = vmatpush1.msra.mxu0 %v315
        %355 = vmatprep.subr.mxu0 0.0
        %356 = vmatpush1.msra.mxu0 %v314
        %357 = vmatprep.subr.mxu0 0.0
        %358 = vmatpush1.msra.mxu0 %v313
        %359 = vmatprep.subr.mxu0 0.0
        %360 = vmatpush2.msra.mxu0 0.0
        %361 = vmatprep.subr.mxu0 0.0
        %362 = vmatpush2.msra.mxu0 0.0
        %363 = vmatprep.subr.mxu0 0.0
        %364 = vmatpush2.msra.mxu0 0.0
        %365 = vmatprep.subr.mxu0 0.0
        %366 = vmatpush2.msra.mxu0 0.0
        %367 = vmatprep.subr.mxu0 0.0
        %368 = vmatpush2.msra.mxu0 0.0
        %369 = vmatprep.subr.mxu0 0.0
        %370 = vmatpush2.msra.mxu0 0.0
        %371 = vmatprep.subr.mxu0 0.0
        %372 = vmatpush2.msra.mxu0 0.0
        %373 = vmatprep.subr.mxu0 0.0
        %374 = vmatpush2.msra.mxu0 0.0
        %375 = vmatprep.subr.mxu0 0.0
        %376 = vmatpush2.msra.mxu0 0.0
        %377 = vmatprep.subr.mxu0 0.0
        %378 = vmatpush2.msra.mxu0 0.0
        %379 = vmatprep.subr.mxu0 0.0
        %380 = vmatpush2.msra.mxu0 0.0
        %381 = vmatprep.subr.mxu0 0.0
        %382 = vmatpush2.msra.mxu0 0.0
        %383 = vmatprep.subr.mxu0 0.0
        %384 = vmatpush2.msra.mxu0 0.0
        %385 = vmatprep.subr.mxu0 0.0
        %386 = vmatpush2.msra.mxu0 0.0
        %387 = vmatprep.subr.mxu0 0.0
        %388 = vmatpush2.msra.mxu0 0.0
        %389 = vmatprep.subr.mxu0 0.0
        %390 = vmatpush2.msra.mxu0 0.0
        %391 = vmatprep.mubr.f32.mxu0 0.0
        %392 = vmatmul.mubr.f32.gmra.mxu0 %v325
        %v393 = vpop.f32.mrf.mxu0
        %v394 = vadd.f32 0.0, %v393
        %v395 = vpop.f32.mrf.mxu0
        %396 = vdwg.mxu0
        %v397 = vadd.f32 %v322, %v394
        %v398 = vmul.f32 %v397, 0.5
        %v399 = vsel %vm321, %v397, %v398
        %v400 = vtanh.pop %v399
        %v401 = vadd.f32 %v400, 1.0
        %v402 = vmul.f32 %v401, 0.5
        %v403 = vsel %vm321, %v400, %v402
        %v404 = vmul.f32 %v403, 0.0
        %406 = vrot.lane.b32.xlu0 %v403, 64
        %v407 = vpop.permute.xlu0 %406
        %v409 = vmul.f32 %v403, %v407
        %411 = vrot.lane.b32.xlu0 %v409, 32
        %v412 = vpop.permute.xlu0 %411
        %v414 = vadd.f32 %v404, %v412
        %v415 = vtanh.pop %v414
        %417 = vrot.lane.b32.xlu0 %v415, 64
        %v418 = vpop.permute.xlu0 %417
        %v420 = vmul.f32 %v403, %v418
        %v421 = vld [vmem:[#allocation7] sm:$0xff]
        %v422 = vld [vmem:[#allocation7 + $0x8] sm:$0xff]
        %v423 = vld [vmem:[#allocation7 + $0x10] sm:$0xff]
        %v424 = vld [vmem:[#allocation7 + $0x18] sm:$0xff]
        %s425 = scalar_lea.vmem %s272, 8 [#allocation2]
        %v426 = vld [vmem:[%s425] sm:$0xff]
        %428 = vrot.lane.b32.xlu0 %v420, 32
        %v429 = vpop.permute.xlu0 %428
        %v430 = vsel %vm323, %v429, 0
        %432 = vmatprep.subr.mxu0 0.0
        %433 = vmatpush1.msra.mxu0 0.0
        %434 = vmatprep.subr.mxu0 0.0
        %435 = vmatpush1.msra.mxu0 0.0
        %436 = vmatprep.subr.mxu0 0.0
        %437 = vmatpush1.msra.mxu0 0.0
        %438 = vmatprep.subr.mxu0 0.0
        %439 = vmatpush1.msra.mxu0 0.0
        %440 = vmatprep.subr.mxu0 0.0
        %441 = vmatpush1.msra.mxu0 0.0
        %442 = vmatprep.subr.mxu0 0.0
        %443 = vmatpush1.msra.mxu0 0.0
        %444 = vmatprep.subr.mxu0 0.0
        %445 = vmatpush1.msra.mxu0 0.0
        %446 = vmatprep.subr.mxu0 0.0
        %447 = vmatpush1.msra.mxu0 0.0
        %448 = vmatprep.subr.mxu0 0.0
        %449 = vmatpush1.msra.mxu0 0.0
        %450 = vmatprep.subr.mxu0 0.0
        %451 = vmatpush1.msra.mxu0 0.0
        %452 = vmatprep.subr.mxu0 0.0
        %453 = vmatpush1.msra.mxu0 0.0
        %454 = vmatprep.subr.mxu0 0.0
        %455 = vmatpush1.msra.mxu0 0.0
        %456 = vmatprep.subr.mxu0 0.0
        %457 = vmatpush1.msra.mxu0 %v316
        %458 = vmatprep.subr.mxu0 0.0
        %459 = vmatpush1.msra.mxu0 %v315
        %460 = vmatprep.subr.mxu0 0.0
        %461 = vmatpush1.msra.mxu0 %v314
        %462 = vmatprep.subr.mxu0 0.0
        %463 = vmatpush1.msra.mxu0 %v313
        %464 = vmatprep.subr.mxu0 0.0
        %465 = vmatpush2.msra.mxu0 0.0
        %466 = vmatprep.subr.mxu0 0.0
        %467 = vmatpush2.msra.mxu0 0.0
        %468 = vmatprep.subr.mxu0 0.0
        %469 = vmatpush2.msra.mxu0 0.0
        %470 = vmatprep.subr.mxu0 0.0
        %471 = vmatpush2.msra.mxu0 0.0
        %472 = vmatprep.subr.mxu0 0.0
        %473 = vmatpush2.msra.mxu0 0.0
        %474 = vmatprep.subr.mxu0 0.0
        %475 = vmatpush2.msra.mxu0 0.0
        %476 = vmatprep.subr.mxu0 0.0
        %477 = vmatpush2.msra.mxu0 0.0
        %478 = vmatprep.subr.mxu0 0.0
        %479 = vmatpush2.msra.mxu0 0.0
        %480 = vmatprep.subr.mxu0 0.0
        %481 = vmatpush2.msra.mxu0 0.0
        %482 = vmatprep.subr.mxu0 0.0
        %483 = vmatpush2.msra.mxu0 0.0
        %484 = vmatprep.subr.mxu0 0.0
        %485 = vmatpush2.msra.mxu0 0.0
        %486 = vmatprep.subr.mxu0 0.0
        %487 = vmatpush2.msra.mxu0 0.0
        %488 = vmatprep.subr.mxu0 0.0
        %489 = vmatpush2.msra.mxu0 0.0
        %490 = vmatprep.subr.mxu0 0.0
        %491 = vmatpush2.msra.mxu0 0.0
        %492 = vmatprep.subr.mxu0 0.0
        %493 = vmatpush2.msra.mxu0 0.0
        %494 = vmatprep.subr.mxu0 0.0
        %495 = vmatpush2.msra.mxu0 0.0
        %496 = vmatprep.mubr.f32.mxu0 0.0
        %497 = vmatmul.mubr.f32.gmra.mxu0 %v430
        %v498 = vpop.f32.mrf.mxu0
        %v499 = vadd.f32 0.0, %v498
        %v500 = vpop.f32.mrf.mxu0
        %501 = vdwg.mxu0
        %v502 = vadd.f32 %v426, %v499
        %v503 = vmul.f32 %v502, 0.5
        %v504 = vsel %vm321, %v502, %v503
        %v505 = vtanh.pop %v504
        %v506 = vadd.f32 %v505, 1.0
        %v507 = vmul.f32 %v506, 0.5
        %v508 = vsel %vm321, %v505, %v507
        %v509 = vmul.f32 %v508, %v414
        %511 = vrot.lane.b32.xlu0 %v508, 64
        %v512 = vpop.permute.xlu0 %511
        %v514 = vmul.f32 %v508, %v512
        %516 = vrot.lane.b32.xlu0 %v514, 32
        %v517 = vpop.permute.xlu0 %516
        %v519 = vadd.f32 %v509, %v517
        %v520 = vtanh.pop %v519
        %522 = vrot.lane.b32.xlu0 %v520, 64
        %v523 = vpop.permute.xlu0 %522
        %v525 = vmul.f32 %v508, %v523
        %v526 = vld [vmem:[#allocation7 + $0x20] sm:$0xff]
        %v527 = vld [vmem:[#allocation7 + $0x28] sm:$0xff]
        %v528 = vld [vmem:[#allocation7 + $0x30] sm:$0xff]
        %v529 = vld [vmem:[#allocation7 + $0x38] sm:$0xff]
        %531 = vrot.lane.b32.xlu0 %v525, 32
        %v532 = vpop.permute.xlu0 %531
        %v533 = vsel %vm323, %v532, 0
        %535 = vmatprep.subr.mxu0 0.0
        %536 = vmatpush1.msra.mxu0 0.0
        %537 = vmatprep.subr.mxu0 0.0
        %538 = vmatpush1.msra.mxu0 0.0
        %539 = vmatprep.subr.mxu0 0.0
        %540 = vmatpush1.msra.mxu0 0.0
        %541 = vmatprep.subr.mxu0 0.0
        %542 = vmatpush1.msra.mxu0 0.0
        %543 = vmatprep.subr.mxu0 0.0
        %544 = vmatpush1.msra.mxu0 0.0
        %545 = vmatprep.subr.mxu0 0.0
        %546 = vmatpush1.msra.mxu0 0.0
        %547 = vmatprep.subr.mxu0 0.0
        %548 = vmatpush1.msra.mxu0 0.0
        %549 = vmatprep.subr.mxu0 0.0
        %550 = vmatpush1.msra.mxu0 0.0
        %551 = vmatprep.subr.mxu0 0.0
        %552 = vmatpush1.msra.mxu0 0.0
        %553 = vmatprep.subr.mxu0 0.0
        %554 = vmatpush1.msra.mxu0 0.0
        %555 = vmatprep.subr.mxu0 0.0
        %556 = vmatpush1.msra.mxu0 0.0
        %557 = vmatprep.subr.mxu0 0.0
        %558 = vmatpush1.msra.mxu0 0.0
        %559 = vmatprep.subr.mxu0 0.0
        %560 = vmatpush1.msra.mxu0 %v529
        %561 = vmatprep.subr.mxu0 0.0
        %562 = vmatpush1.msra.mxu0 %v528
        %563 = vmatprep.subr.mxu0 0.0
        %564 = vmatpush1.msra.mxu0 %v527
        %565 = vmatprep.subr.mxu0 0.0
        %566 = vmatpush1.msra.mxu0 %v526
        %567 = vmatprep.subr.mxu0 0.0
        %568 = vmatpush2.msra.mxu0 0.0
        %569 = vmatprep.subr.mxu0 0.0
        %570 = vmatpush2.msra.mxu0 0.0
        %571 = vmatprep.subr.mxu0 0.0
        %572 = vmatpush2.msra.mxu0 0.0
        %573 = vmatprep.subr.mxu0 0.0
        %574 = vmatpush2.msra.mxu0 0.0
        %575 = vmatprep.subr.mxu0 0.0
        %576 = vmatpush2.msra.mxu0 0.0
        %577 = vmatprep.subr.mxu0 0.0
        %578 = vmatpush2.msra.mxu0 0.0
        %579 = vmatprep.subr.mxu0 0.0
        %580 = vmatpush2.msra.mxu0 0.0
        %581 = vmatprep.subr.mxu0 0.0
        %582 = vmatpush2.msra.mxu0 0.0
        %583 = vmatprep.subr.mxu0 0.0
        %584 = vmatpush2.msra.mxu0 0.0
        %585 = vmatprep.subr.mxu0 0.0
        %586 = vmatpush2.msra.mxu0 0.0
        %587 = vmatprep.subr.mxu0 0.0
        %588 = vmatpush2.msra.mxu0 0.0
        %589 = vmatprep.subr.mxu0 0.0
        %590 = vmatpush2.msra.mxu0 0.0
        %591 = vmatprep.subr.mxu0 0.0
        %592 = vmatpush2.msra.mxu0 0.0
        %593 = vmatprep.subr.mxu0 0.0
        %594 = vmatpush2.msra.mxu0 0.0
        %595 = vmatprep.subr.mxu0 0.0
        %596 = vmatpush2.msra.mxu0 0.0
        %597 = vmatprep.subr.mxu0 0.0
        %598 = vmatpush2.msra.mxu0 0.0
        %599 = vmatprep.mubr.f32.mxu0 0.0
        %600 = vmatmul.mubr.f32.gmra.mxu0 %v533
        %v601 = vpop.f32.mrf.mxu0
        %v602 = vadd.f32 0.0, %v601
        %v603 = vpop.f32.mrf.mxu0
        %604 = vdwg.mxu0
        %605 = vmatprep.subr.mxu0 0.0
        %606 = vmatpush1.msra.mxu0 0.0
        %607 = vmatprep.subr.mxu0 0.0
        %608 = vmatpush1.msra.mxu0 0.0
        %609 = vmatprep.subr.mxu0 0.0
        %610 = vmatpush1.msra.mxu0 0.0
        %611 = vmatprep.subr.mxu0 0.0
        %612 = vmatpush1.msra.mxu0 0.0
        %613 = vmatprep.subr.mxu0 0.0
        %614 = vmatpush1.msra.mxu0 0.0
        %615 = vmatprep.subr.mxu0 0.0
        %616 = vmatpush1.msra.mxu0 0.0
        %617 = vmatprep.subr.mxu0 0.0
        %618 = vmatpush1.msra.mxu0 0.0
        %619 = vmatprep.subr.mxu0 0.0
        %620 = vmatpush1.msra.mxu0 0.0
        %621 = vmatprep.subr.mxu0 0.0
        %622 = vmatpush1.msra.mxu0 0.0
        %623 = vmatprep.subr.mxu0 0.0
        %624 = vmatpush1.msra.mxu0 0.0
        %625 = vmatprep.subr.mxu0 0.0
        %626 = vmatpush1.msra.mxu0 0.0
        %627 = vmatprep.subr.mxu0 0.0
        %628 = vmatpush1.msra.mxu0 0.0
        %629 = vmatprep.subr.mxu0 0.0
        %630 = vmatpush1.msra.mxu0 %v424
        %631 = vmatprep.subr.mxu0 0.0
        %632 = vmatpush1.msra.mxu0 %v423
        %633 = vmatprep.subr.mxu0 0.0
        %634 = vmatpush1.msra.mxu0 %v422
        %635 = vmatprep.subr.mxu0 0.0
        %636 = vmatpush1.msra.mxu0 %v421
        %637 = vmatprep.subr.mxu0 0.0
        %638 = vmatpush2.msra.mxu0 0.0
        %639 = vmatprep.subr.mxu0 0.0
        %640 = vmatpush2.msra.mxu0 0.0
        %641 = vmatprep.subr.mxu0 0.0
        %642 = vmatpush2.msra.mxu0 0.0
        %643 = vmatprep.subr.mxu0 0.0
        %644 = vmatpush2.msra.mxu0 0.0
        %645 = vmatprep.subr.mxu0 0.0
        %646 = vmatpush2.msra.mxu0 0.0
        %647 = vmatprep.subr.mxu0 0.0
        %648 = vmatpush2.msra.mxu0 0.0
        %649 = vmatprep.subr.mxu0 0.0
        %650 = vmatpush2.msra.mxu0 0.0
        %651 = vmatprep.subr.mxu0 0.0
        %652 = vmatpush2.msra.mxu0 0.0
        %653 = vmatprep.subr.mxu0 0.0
        %654 = vmatpush2.msra.mxu0 0.0
        %655 = vmatprep.subr.mxu0 0.0
        %656 = vmatpush2.msra.mxu0 0.0
        %657 = vmatprep.subr.mxu0 0.0
        %658 = vmatpush2.msra.mxu0 0.0
        %659 = vmatprep.subr.mxu0 0.0
        %660 = vmatpush2.msra.mxu0 0.0
        %661 = vmatprep.subr.mxu0 0.0
        %662 = vmatpush2.msra.mxu0 0.0
        %663 = vmatprep.subr.mxu0 0.0
        %664 = vmatpush2.msra.mxu0 0.0
        %665 = vmatprep.subr.mxu0 0.0
        %666 = vmatpush2.msra.mxu0 0.0
        %667 = vmatprep.subr.mxu0 0.0
        %668 = vmatpush2.msra.mxu0 0.0
        %669 = vmatprep.mubr.f32.mxu0 0.0
        %670 = vmatmul.mubr.f32.gmra.mxu0 %v430
        %v671 = vpop.f32.mrf.mxu0
        %v672 = vadd.f32 %v602, %v671
        %v673 = vpop.f32.mrf.mxu0
        %674 = vdwg.mxu0
        %s675 = scalar_lea.vmem %s272, 16 [#allocation2]
        %v676 = vld [vmem:[%s675] sm:$0xff]
        %677 = vmatprep.subr.mxu0 0.0
        %678 = vmatpush1.msra.mxu0 0.0
        %679 = vmatprep.subr.mxu0 0.0
        %680 = vmatpush1.msra.mxu0 0.0
        %681 = vmatprep.subr.mxu0 0.0
        %682 = vmatpush1.msra.mxu0 0.0
        %683 = vmatprep.subr.mxu0 0.0
        %684 = vmatpush1.msra.mxu0 0.0
        %685 = vmatprep.subr.mxu0 0.0
        %686 = vmatpush1.msra.mxu0 0.0
        %687 = vmatprep.subr.mxu0 0.0
        %688 = vmatpush1.msra.mxu0 0.0
        %689 = vmatprep.subr.mxu0 0.0
        %690 = vmatpush1.msra.mxu0 0.0
        %691 = vmatprep.subr.mxu0 0.0
        %692 = vmatpush1.msra.mxu0 0.0
        %693 = vmatprep.subr.mxu0 0.0
        %694 = vmatpush1.msra.mxu0 0.0
        %695 = vmatprep.subr.mxu0 0.0
        %696 = vmatpush1.msra.mxu0 0.0
        %697 = vmatprep.subr.mxu0 0.0
        %698 = vmatpush1.msra.mxu0 0.0
        %699 = vmatprep.subr.mxu0 0.0
        %700 = vmatpush1.msra.mxu0 0.0
        %701 = vmatprep.subr.mxu0 0.0
        %702 = vmatpush1.msra.mxu0 %v316
        %703 = vmatprep.subr.mxu0 0.0
        %704 = vmatpush1.msra.mxu0 %v315
        %705 = vmatprep.subr.mxu0 0.0
        %706 = vmatpush1.msra.mxu0 %v314
        %707 = vmatprep.subr.mxu0 0.0
        %708 = vmatpush1.msra.mxu0 %v313
        %709 = vmatprep.subr.mxu0 0.0
        %710 = vmatpush2.msra.mxu0 0.0
        %711 = vmatprep.subr.mxu0 0.0
        %712 = vmatpush2.msra.mxu0 0.0
        %713 = vmatprep.subr.mxu0 0.0
        %714 = vmatpush2.msra.mxu0 0.0
        %715 = vmatprep.subr.mxu0 0.0
        %716 = vmatpush2.msra.mxu0 0.0
        %717 = vmatprep.subr.mxu0 0.0
        %718 = vmatpush2.msra.mxu0 0.0
        %719 = vmatprep.subr.mxu0 0.0
        %720 = vmatpush2.msra.mxu0 0.0
        %721 = vmatprep.subr.mxu0 0.0
        %722 = vmatpush2.msra.mxu0 0.0
        %723 = vmatprep.subr.mxu0 0.0
        %724 = vmatpush2.msra.mxu0 0.0
        %725 = vmatprep.subr.mxu0 0.0
        %726 = vmatpush2.msra.mxu0 0.0
        %727 = vmatprep.subr.mxu0 0.0
        %728 = vmatpush2.msra.mxu0 0.0
        %729 = vmatprep.subr.mxu0 0.0
        %730 = vmatpush2.msra.mxu0 0.0
        %731 = vmatprep.subr.mxu0 0.0
        %732 = vmatpush2.msra.mxu0 0.0
        %733 = vmatprep.subr.mxu0 0.0
        %734 = vmatpush2.msra.mxu0 0.0
        %735 = vmatprep.subr.mxu0 0.0
        %736 = vmatpush2.msra.mxu0 0.0
        %737 = vmatprep.subr.mxu0 0.0
        %738 = vmatpush2.msra.mxu0 0.0
        %739 = vmatprep.subr.mxu0 0.0
        %740 = vmatpush2.msra.mxu0 0.0
        %741 = vmatprep.mubr.f32.mxu0 0.0
        %742 = vmatmul.mubr.f32.gmra.mxu0 %v533
        %v743 = vpop.f32.mrf.mxu0
        %v744 = vadd.f32 0.0, %v743
        %v745 = vpop.f32.mrf.mxu0
        %746 = vdwg.mxu0
        %v747 = vadd.f32 %v676, %v744
        %v748 = vmul.f32 %v747, 0.5
        %v749 = vsel %vm321, %v747, %v748
        %v750 = vtanh.pop %v749
        %v751 = vadd.f32 %v750, 1.0
        %v752 = vmul.f32 %v751, 0.5
        %v753 = vsel %vm321, %v750, %v752
        %v754 = vmul.f32 %v753, %v519
        %756 = vrot.lane.b32.xlu0 %v753, 64
        %v757 = vpop.permute.xlu0 %756
        %v759 = vmul.f32 %v753, %v757
        %761 = vrot.lane.b32.xlu0 %v759, 32
        %v762 = vpop.permute.xlu0 %761
        %v764 = vadd.f32 %v754, %v762
        %v765 = vtanh.pop %v764
        %767 = vrot.lane.b32.xlu0 %v765, 64
        %v768 = vpop.permute.xlu0 %767
        %v770 = vmul.f32 %v753, %v768
        %v771 = vld [vmem:[#allocation7 + $0x40] sm:$0xff]
        %v772 = vld [vmem:[#allocation7 + $0x48] sm:$0xff]
        %v773 = vld [vmem:[#allocation7 + $0x50] sm:$0xff]
        %v774 = vld [vmem:[#allocation7 + $0x58] sm:$0xff]
        %776 = vrot.lane.b32.xlu0 %v770, 32
        %v777 = vpop.permute.xlu0 %776
        %v778 = vsel %vm323, %v777, 0
        %780 = vmatprep.subr.mxu0 0.0
        %781 = vmatpush1.msra.mxu0 0.0
        %782 = vmatprep.subr.mxu0 0.0
        %783 = vmatpush1.msra.mxu0 0.0
        %784 = vmatprep.subr.mxu0 0.0
        %785 = vmatpush1.msra.mxu0 0.0
        %786 = vmatprep.subr.mxu0 0.0
        %787 = vmatpush1.msra.mxu0 0.0
        %788 = vmatprep.subr.mxu0 0.0
        %789 = vmatpush1.msra.mxu0 0.0
        %790 = vmatprep.subr.mxu0 0.0
        %791 = vmatpush1.msra.mxu0 0.0
        %792 = vmatprep.subr.mxu0 0.0
        %793 = vmatpush1.msra.mxu0 0.0
        %794 = vmatprep.subr.mxu0 0.0
        %795 = vmatpush1.msra.mxu0 0.0
        %796 = vmatprep.subr.mxu0 0.0
        %797 = vmatpush1.msra.mxu0 0.0
        %798 = vmatprep.subr.mxu0 0.0
        %799 = vmatpush1.msra.mxu0 0.0
        %800 = vmatprep.subr.mxu0 0.0
        %801 = vmatpush1.msra.mxu0 0.0
        %802 = vmatprep.subr.mxu0 0.0
        %803 = vmatpush1.msra.mxu0 0.0
        %804 = vmatprep.subr.mxu0 0.0
        %805 = vmatpush1.msra.mxu0 %v774
        %806 = vmatprep.subr.mxu0 0.0
        %807 = vmatpush1.msra.mxu0 %v773
        %808 = vmatprep.subr.mxu0 0.0
        %809 = vmatpush1.msra.mxu0 %v772
        %810 = vmatprep.subr.mxu0 0.0
        %811 = vmatpush1.msra.mxu0 %v771
        %812 = vmatprep.subr.mxu0 0.0
        %813 = vmatpush2.msra.mxu0 0.0
        %814 = vmatprep.subr.mxu0 0.0
        %815 = vmatpush2.msra.mxu0 0.0
        %816 = vmatprep.subr.mxu0 0.0
        %817 = vmatpush2.msra.mxu0 0.0
        %818 = vmatprep.subr.mxu0 0.0
        %819 = vmatpush2.msra.mxu0 0.0
        %820 = vmatprep.subr.mxu0 0.0
        %821 = vmatpush2.msra.mxu0 0.0
        %822 = vmatprep.subr.mxu0 0.0
        %823 = vmatpush2.msra.mxu0 0.0
        %824 = vmatprep.subr.mxu0 0.0
        %825 = vmatpush2.msra.mxu0 0.0
        %826 = vmatprep.subr.mxu0 0.0
        %827 = vmatpush2.msra.mxu0 0.0
        %828 = vmatprep.subr.mxu0 0.0
        %829 = vmatpush2.msra.mxu0 0.0
        %830 = vmatprep.subr.mxu0 0.0
        %831 = vmatpush2.msra.mxu0 0.0
        %832 = vmatprep.subr.mxu0 0.0
        %833 = vmatpush2.msra.mxu0 0.0
        %834 = vmatprep.subr.mxu0 0.0
        %835 = vmatpush2.msra.mxu0 0.0
        %836 = vmatprep.subr.mxu0 0.0
        %837 = vmatpush2.msra.mxu0 0.0
        %838 = vmatprep.subr.mxu0 0.0
        %839 = vmatpush2.msra.mxu0 0.0
        %840 = vmatprep.subr.mxu0 0.0
        %841 = vmatpush2.msra.mxu0 0.0
        %842 = vmatprep.subr.mxu0 0.0
        %843 = vmatpush2.msra.mxu0 0.0
        %844 = vmatprep.mubr.f32.mxu0 0.0
        %845 = vmatmul.mubr.f32.gmra.mxu0 %v778
        %v846 = vpop.f32.mrf.mxu0
        %v847 = vadd.f32 0.0, %v846
        %v848 = vpop.f32.mrf.mxu0
        %849 = vdwg.mxu0
        %v850 = vadd.f32 %v672, %v847
        %s851 = scalar_lea.vmem %s272, 24 [#allocation2]
        %v852 = vld [vmem:[%s851] sm:$0xff]
        %853 = vmatprep.subr.mxu0 0.0
        %854 = vmatpush1.msra.mxu0 0.0
        %855 = vmatprep.subr.mxu0 0.0
        %856 = vmatpush1.msra.mxu0 0.0
        %857 = vmatprep.subr.mxu0 0.0
        %858 = vmatpush1.msra.mxu0 0.0
        %859 = vmatprep.subr.mxu0 0.0
        %860 = vmatpush1.msra.mxu0 0.0
        %861 = vmatprep.subr.mxu0 0.0
        %862 = vmatpush1.msra.mxu0 0.0
        %863 = vmatprep.subr.mxu0 0.0
        %864 = vmatpush1.msra.mxu0 0.0
        %865 = vmatprep.subr.mxu0 0.0
        %866 = vmatpush1.msra.mxu0 0.0
        %867 = vmatprep.subr.mxu0 0.0
        %868 = vmatpush1.msra.mxu0 0.0
        %869 = vmatprep.subr.mxu0 0.0
        %870 = vmatpush1.msra.mxu0 0.0
        %871 = vmatprep.subr.mxu0 0.0
        %872 = vmatpush1.msra.mxu0 0.0
        %873 = vmatprep.subr.mxu0 0.0
        %874 = vmatpush1.msra.mxu0 0.0
        %875 = vmatprep.subr.mxu0 0.0
        %876 = vmatpush1.msra.mxu0 0.0
        %877 = vmatprep.subr.mxu0 0.0
        %878 = vmatpush1.msra.mxu0 %v316
        %879 = vmatprep.subr.mxu0 0.0
        %880 = vmatpush1.msra.mxu0 %v315
        %881 = vmatprep.subr.mxu0 0.0
        %882 = vmatpush1.msra.mxu0 %v314
        %883 = vmatprep.subr.mxu0 0.0
        %884 = vmatpush1.msra.mxu0 %v313
        %885 = vmatprep.subr.mxu0 0.0
        %886 = vmatpush2.msra.mxu0 0.0
        %887 = vmatprep.subr.mxu0 0.0
        %888 = vmatpush2.msra.mxu0 0.0
        %889 = vmatprep.subr.mxu0 0.0
        %890 = vmatpush2.msra.mxu0 0.0
        %891 = vmatprep.subr.mxu0 0.0
        %892 = vmatpush2.msra.mxu0 0.0
        %893 = vmatprep.subr.mxu0 0.0
        %894 = vmatpush2.msra.mxu0 0.0
        %895 = vmatprep.subr.mxu0 0.0
        %896 = vmatpush2.msra.mxu0 0.0
        %897 = vmatprep.subr.mxu0 0.0
        %898 = vmatpush2.msra.mxu0 0.0
        %899 = vmatprep.subr.mxu0 0.0
        %900 = vmatpush2.msra.mxu0 0.0
        %901 = vmatprep.subr.mxu0 0.0
        %902 = vmatpush2.msra.mxu0 0.0
        %903 = vmatprep.subr.mxu0 0.0
        %904 = vmatpush2.msra.mxu0 0.0
        %905 = vmatprep.subr.mxu0 0.0
        %906 = vmatpush2.msra.mxu0 0.0
        %907 = vmatprep.subr.mxu0 0.0
        %908 = vmatpush2.msra.mxu0 0.0
        %909 = vmatprep.subr.mxu0 0.0
        %910 = vmatpush2.msra.mxu0 0.0
        %911 = vmatprep.subr.mxu0 0.0
        %912 = vmatpush2.msra.mxu0 0.0
        %913 = vmatprep.subr.mxu0 0.0
        %914 = vmatpush2.msra.mxu0 0.0
        %915 = vmatprep.subr.mxu0 0.0
        %916 = vmatpush2.msra.mxu0 0.0
        %917 = vmatprep.mubr.f32.mxu0 0.0
        %918 = vmatmul.mubr.f32.gmra.mxu0 %v778
        %v919 = vpop.f32.mrf.mxu0
        %v920 = vadd.f32 0.0, %v919
        %v921 = vpop.f32.mrf.mxu0
        %922 = vdwg.mxu0
        %v923 = vadd.f32 %v852, %v920
        %v924 = vmul.f32 %v923, 0.5
        %v925 = vsel %vm321, %v923, %v924
        %v926 = vtanh.pop %v925
        %v927 = vadd.f32 %v926, 1.0
        %v928 = vmul.f32 %v927, 0.5
        %v929 = vsel %vm321, %v926, %v928
        %v930 = vmul.f32 %v929, %v764
        %932 = vrot.lane.b32.xlu0 %v929, 64
        %v933 = vpop.permute.xlu0 %932
        %v935 = vmul.f32 %v929, %v933
        %937 = vrot.lane.b32.xlu0 %v935, 32
        %v938 = vpop.permute.xlu0 %937
        %v940 = vadd.f32 %v930, %v938
        %v941 = vtanh.pop %v940
        %943 = vrot.lane.b32.xlu0 %v941, 64
        %v944 = vpop.permute.xlu0 %943
        %v946 = vmul.f32 %v929, %v944
        %v947 = vld [vmem:[#allocation7 + $0x60] sm:$0xff]
        %v948 = vld [vmem:[#allocation7 + $0x68] sm:$0xff]
        %v949 = vld [vmem:[#allocation7 + $0x70] sm:$0xff]
        %v950 = vld [vmem:[#allocation7 + $0x78] sm:$0xff]
        %952 = vrot.lane.b32.xlu0 %v946, 32
        %v953 = vpop.permute.xlu0 %952
        %v954 = vsel %vm323, %v953, 0
        %956 = vmatprep.subr.mxu0 0.0
        %957 = vmatpush1.msra.mxu0 0.0
        %958 = vmatprep.subr.mxu0 0.0
        %959 = vmatpush1.msra.mxu0 0.0
        %960 = vmatprep.subr.mxu0 0.0
        %961 = vmatpush1.msra.mxu0 0.0
        %962 = vmatprep.subr.mxu0 0.0
        %963 = vmatpush1.msra.mxu0 0.0
        %964 = vmatprep.subr.mxu0 0.0
        %965 = vmatpush1.msra.mxu0 0.0
        %966 = vmatprep.subr.mxu0 0.0
        %967 = vmatpush1.msra.mxu0 0.0
        %968 = vmatprep.subr.mxu0 0.0
        %969 = vmatpush1.msra.mxu0 0.0
        %970 = vmatprep.subr.mxu0 0.0
        %971 = vmatpush1.msra.mxu0 0.0
        %972 = vmatprep.subr.mxu0 0.0
        %973 = vmatpush1.msra.mxu0 0.0
        %974 = vmatprep.subr.mxu0 0.0
        %975 = vmatpush1.msra.mxu0 0.0
        %976 = vmatprep.subr.mxu0 0.0
        %977 = vmatpush1.msra.mxu0 0.0
        %978 = vmatprep.subr.mxu0 0.0
        %979 = vmatpush1.msra.mxu0 0.0
        %980 = vmatprep.subr.mxu0 0.0
        %981 = vmatpush1.msra.mxu0 %v950
        %982 = vmatprep.subr.mxu0 0.0
        %983 = vmatpush1.msra.mxu0 %v949
        %984 = vmatprep.subr.mxu0 0.0
        %985 = vmatpush1.msra.mxu0 %v948
        %986 = vmatprep.subr.mxu0 0.0
        %987 = vmatpush1.msra.mxu0 %v947
        %988 = vmatprep.subr.mxu0 0.0
        %989 = vmatpush2.msra.mxu0 0.0
        %990 = vmatprep.subr.mxu0 0.0
        %991 = vmatpush2.msra.mxu0 0.0
        %992 = vmatprep.subr.mxu0 0.0
        %993 = vmatpush2.msra.mxu0 0.0
        %994 = vmatprep.subr.mxu0 0.0
        %995 = vmatpush2.msra.mxu0 0.0
        %996 = vmatprep.subr.mxu0 0.0
        %997 = vmatpush2.msra.mxu0 0.0
        %998 = vmatprep.subr.mxu0 0.0
        %999 = vmatpush2.msra.mxu0 0.0
        %1000 = vmatprep.subr.mxu0 0.0
        %1001 = vmatpush2.msra.mxu0 0.0
        %1002 = vmatprep.subr.mxu0 0.0
        %1003 = vmatpush2.msra.mxu0 0.0
        %1004 = vmatprep.subr.mxu0 0.0
        %1005 = vmatpush2.msra.mxu0 0.0
        %1006 = vmatprep.subr.mxu0 0.0
        %1007 = vmatpush2.msra.mxu0 0.0
        %1008 = vmatprep.subr.mxu0 0.0
        %1009 = vmatpush2.msra.mxu0 0.0
        %1010 = vmatprep.subr.mxu0 0.0
        %1011 = vmatpush2.msra.mxu0 0.0
        %1012 = vmatprep.subr.mxu0 0.0
        %1013 = vmatpush2.msra.mxu0 0.0
        %1014 = vmatprep.subr.mxu0 0.0
        %1015 = vmatpush2.msra.mxu0 0.0
        %1016 = vmatprep.subr.mxu0 0.0
        %1017 = vmatpush2.msra.mxu0 0.0
        %1018 = vmatprep.subr.mxu0 0.0
        %1019 = vmatpush2.msra.mxu0 0.0
        %1020 = vmatprep.mubr.f32.mxu0 0.0
        %1021 = vmatmul.mubr.f32.gmra.mxu0 %v954
        %v1022 = vpop.f32.mrf.mxu0
        %v1023 = vadd.f32 0.0, %v1022
        %v1024 = vpop.f32.mrf.mxu0
        %1025 = vdwg.mxu0
        %v1026 = vadd.f32 %v850, %v1023
        %v1027 = vld [vmem:[%s3] sm:$0x1]
        %v1029 = vlaneseq
        %v1030 = vshrl.u32 %v1029, 7
        %v1031 = vsub.s32 0, %v1030
        %v1032 = vrot.slane %v1027, %v1031
        %v1034 = vadd.f32 %v1026, %v1032
        %v1035 = vmax.f32 %v1034, 0.0
        %v1036 = vld [vmem:[#allocation8] sm:$0xff]
        %v1037 = vld [vmem:[#allocation8 + $0x8] sm:$0xff]
        %v1038 = vld [vmem:[#allocation8 + $0x10] sm:$0xff]
        %v1039 = vld [vmem:[#allocation8 + $0x18] sm:$0xff]
        %v1040 = vld [vmem:[#allocation8 + $0x20] sm:$0xff]
        %v1041 = vld [vmem:[#allocation8 + $0x28] sm:$0xff]
        %v1042 = vld [vmem:[#allocation8 + $0x30] sm:$0xff]
        %v1043 = vld [vmem:[#allocation8 + $0x38] sm:$0xff]
        %v1044 = vld [vmem:[#allocation8 + $0x40] sm:$0xff]
        %v1045 = vld [vmem:[#allocation8 + $0x48] sm:$0xff]
        %v1046 = vld [vmem:[#allocation8 + $0x50] sm:$0xff]
        %v1047 = vld [vmem:[#allocation8 + $0x58] sm:$0xff]
        %v1048 = vld [vmem:[#allocation8 + $0x60] sm:$0xff]
        %v1049 = vld [vmem:[#allocation8 + $0x68] sm:$0xff]
        %v1050 = vld [vmem:[#allocation8 + $0x70] sm:$0xff]
        %v1051 = vld [vmem:[#allocation8 + $0x78] sm:$0xff]
        %v1052 = vld [vmem:[%s5] sm:$0x1]
        %v1054 = vlaneseq
        %v1055 = vshrl.u32 %v1054, 7
        %v1056 = vsub.s32 0, %v1055
        %v1057 = vrot.slane %v1052, %v1056
        %1059 = vmatprep.subr.mxu0 0.0
        %1060 = vmatpush1.msra.mxu0 %v1051
        %1061 = vmatprep.subr.mxu0 0.0
        %1062 = vmatpush1.msra.mxu0 %v1050
        %1063 = vmatprep.subr.mxu0 0.0
        %1064 = vmatpush1.msra.mxu0 %v1049
        %1065 = vmatprep.subr.mxu0 0.0
        %1066 = vmatpush1.msra.mxu0 %v1048
        %1067 = vmatprep.subr.mxu0 0.0
        %1068 = vmatpush1.msra.mxu0 %v1047
        %1069 = vmatprep.subr.mxu0 0.0
        %1070 = vmatpush1.msra.mxu0 %v1046
        %1071 = vmatprep.subr.mxu0 0.0
        %1072 = vmatpush1.msra.mxu0 %v1045
        %1073 = vmatprep.subr.mxu0 0.0
        %1074 = vmatpush1.msra.mxu0 %v1044
        %1075 = vmatprep.subr.mxu0 0.0
        %1076 = vmatpush1.msra.mxu0 %v1043
        %1077 = vmatprep.subr.mxu0 0.0
        %1078 = vmatpush1.msra.mxu0 %v1042
        %1079 = vmatprep.subr.mxu0 0.0
        %1080 = vmatpush1.msra.mxu0 %v1041
        %1081 = vmatprep.subr.mxu0 0.0
        %1082 = vmatpush1.msra.mxu0 %v1040
        %1083 = vmatprep.subr.mxu0 0.0
        %1084 = vmatpush1.msra.mxu0 %v1039
        %1085 = vmatprep.subr.mxu0 0.0
        %1086 = vmatpush1.msra.mxu0 %v1038
        %1087 = vmatprep.subr.mxu0 0.0
        %1088 = vmatpush1.msra.mxu0 %v1037
        %1089 = vmatprep.subr.mxu0 0.0
        %1090 = vmatpush1.msra.mxu0 %v1036
        %1091 = vmatprep.subr.mxu0 0.0
        %1092 = vmatpush2.msra.mxu0 0.0
        %1093 = vmatprep.subr.mxu0 0.0
        %1094 = vmatpush2.msra.mxu0 0.0
        %1095 = vmatprep.subr.mxu0 0.0
        %1096 = vmatpush2.msra.mxu0 0.0
        %1097 = vmatprep.subr.mxu0 0.0
        %1098 = vmatpush2.msra.mxu0 0.0
        %1099 = vmatprep.subr.mxu0 0.0
        %1100 = vmatpush2.msra.mxu0 0.0
        %1101 = vmatprep.subr.mxu0 0.0
        %1102 = vmatpush2.msra.mxu0 0.0
        %1103 = vmatprep.subr.mxu0 0.0
        %1104 = vmatpush2.msra.mxu0 0.0
        %1105 = vmatprep.subr.mxu0 0.0
        %1106 = vmatpush2.msra.mxu0 0.0
        %1107 = vmatprep.subr.mxu0 0.0
        %1108 = vmatpush2.msra.mxu0 0.0
        %1109 = vmatprep.subr.mxu0 0.0
        %1110 = vmatpush2.msra.mxu0 0.0
        %1111 = vmatprep.subr.mxu0 0.0
        %1112 = vmatpush2.msra.mxu0 0.0
        %1113 = vmatprep.subr.mxu0 0.0
        %1114 = vmatpush2.msra.mxu0 0.0
        %1115 = vmatprep.subr.mxu0 0.0
        %1116 = vmatpush2.msra.mxu0 0.0
        %1117 = vmatprep.subr.mxu0 0.0
        %1118 = vmatpush2.msra.mxu0 0.0
        %1119 = vmatprep.subr.mxu0 0.0
        %1120 = vmatpush2.msra.mxu0 0.0
        %1121 = vmatprep.subr.mxu0 0.0
        %1122 = vmatpush2.msra.mxu0 0.0
        %1123 = vmatprep.mubr.f32.mxu0 0.0
        %1124 = vmatmul.mubr.f32.gmra.mxu0 %v1035
        %v1125 = vpop.f32.mrf.mxu0
        %v1126 = vadd.f32 %v1057, %v1125
        %v1127 = vpop.f32.mrf.mxu0
        %1128 = vdwg.mxu0
        %1129 = vst [vmem:[%s312] sm:$0xff] %v1126
        %s1130 = sand.u32 %s164, 1
        %s1131 = scalar_lea.sflag [#allocation4], %s1130
        %s1132 = sand.u32 %s164, 1
        %s1133 = smul.addr %s1132, 8
        %s1134 = scalar_lea.vmem [#allocation10], %s1133
        // Predicated region
        $region61: #{tpu_custom_call.1} parent=43 // pred_check
          %p1135 = pneg %p174
        $region62: #{tpu_custom_call.1} parent=43 // pred_check_branch
          %1137 = sbr.rel (%p1135) target = $region64
        $region63: #{tpu_custom_call.1} parent=43 // pred_region
          %s1139 = ssub.s32 128, 128
          %1140 = vsyncadd %s1131, %s1139
          %s1141 = smul.addr %s25, 128
          %s1142 = scalar_lea.hbm %s6, %s1141
          %s1144 = sshll.u32 %s1134, 4
          %s1145 = int_to_ptr.vmem [resolvable:$true] %s1144
          %1147 = dma.vmem_to_hbm [thread:$0]  %s1145, 128, %s1142, %s1131
        $region64: #{tpu_custom_call.1} parent=43 // pred_fallthru
          _
      $region44: #{tpu_custom_call.1} parent=5 // pred_fallthru
        _
      %p1148 = scmp.le.s32.totalorder 2, %s20
      // Predicated region
      $region65: #{tpu_custom_call.1} parent=5 // pred_check
        %p1149 = pneg %p1148
      $region66: #{tpu_custom_call.1} parent=5 // pred_check_branch
        %1151 = sbr.rel (%p1149) target = $region68
      $region67: #{tpu_custom_call.1} parent=5 // pred_region
        %s1152 = ssub.s32 %s20, 2
        // Predicated region
        $region69: #{tpu_custom_call.1} parent=67 // pred_check
          %p1153 = pneg %p180
        $region70: #{tpu_custom_call.1} parent=67 // pred_check_branch
          %1155 = sbr.rel (%p1153) target = $region72
        $region71: #{tpu_custom_call.1} parent=67 // pred_region
          %s1156 = sand.u32 %s165, 1
          %s1157 = scalar_lea.sflag [#allocation4], %s1156
          %s1158 = sand.u32 %s165, 1
          %s1159 = smul.addr %s1158, 8
          %s1160 = scalar_lea.vmem [#allocation10], %s1159
          %1161 = dma.done %s1157, 128
        $region72: #{tpu_custom_call.1} parent=67 // pred_fallthru
          _
      $region68: #{tpu_custom_call.1} parent=5 // pred_fallthru
        _
    $region6: #{tpu_custom_call.1} parent=1 // loop_footer
      %s24 = sadd.s32 1, %s20
    $region7: #{tpu_custom_call.1} parent=1 // loop_footer_branch
      %19 = sbr.rel target = $region3
    $region8: #{tpu_custom_call.1} parent=1 // loop_exit
      _
    %1162 = vsyncpa [#allocation3], 1
    %s1163 = scalar_lea.sflag [#allocation3], 1
    %1164 = vsyncpa %s1163, 1
    %1165 = vsyncpa [#allocation6], 1
    %1166 = vsyncpa [#allocation9], 1
    %1167 = vsyncpa [#allocation4], 1
    %s1168 = scalar_lea.sflag [#allocation4], 1
    %1169 = vsyncpa %s1168, 1

</llo_original>
